<compile_context>
chip_gen: v7x
topology: tpu7x:2x2x1
jax: 0.10.0
libtpu: 0.0.40
codegen_flags: <defaults>
</compile_context>

<pallas_src>
import jax
import jax.numpy as jnp
from jax import lax
from jax.experimental import pallas as pl
from jax.experimental.pallas import tpu as pltpu


def _lstm_recurrence_kernel(gx_ref, whh_ref, hs_ref):
    """Serial LSTM recurrence only.

    gx_ref : (T, B, 4H)  precomputed x_t @ W_ih^T + (b_ih + b_hh)
    whh_ref: (H, 4H)     W_hh^T (pre-transposed for right-multiplication)
    hs_ref : (T, B, H)   output hidden states h_1..h_T
    """
    T = gx_ref.shape[0]
    B = gx_ref.shape[1]
    H = hs_ref.shape[-1]

    whh = whh_ref[...]                                   # loop-invariant (H, 4H)

    def step(t, carry):
        h_prev, c_prev = carry
        # gates_t = gates_x[t] + h_{t-1} @ W_hh^T   (bias already folded into gates_x)
        gates = gx_ref[t] + jnp.dot(h_prev, whh,
                                    preferred_element_type=jnp.float32)  # (B, 4H)
        # PyTorch gate order: i, f, g, o.
        # (At production sizes keep H a multiple of 128 so these slices are
        #  lane-aligned, zero-cost views.)
        i_g = jax.nn.sigmoid(gates[:, 0 * H:1 * H])
        f_g = jax.nn.sigmoid(gates[:, 1 * H:2 * H])
        g_g = jnp.tanh(gates[:, 2 * H:3 * H])
        o_g = jax.nn.sigmoid(gates[:, 3 * H:4 * H])

        c_new = f_g * c_prev + i_g * g_g
        h_new = o_g * jnp.tanh(c_new)

        hs_ref[t] = h_new
        return (h_new, c_new)

    h0 = jnp.zeros((B, H), jnp.float32)
    c0 = jnp.zeros((B, H), jnp.float32)
    # Short, fixed trip count -> fully unroll for LLO scheduler visibility.
    lax.fori_loop(0, T, step, (h0, c0), unroll=True)


def lstm_model_forward(x, params):
    """x: (B, T, X) batch_first, float32. Returns (B, T, Y). Matches LSTMModel.forward."""
    w_ih, w_hh, b_ih, b_hh, w_fc, b_fc = params
    B, T, X = x.shape
    H = w_hh.shape[1]                   # w_hh: (4H, H)
    Y = w_fc.shape[0]                   # w_fc: (Y, H)

    x_tbx = jnp.transpose(x, (1, 0, 2))                          # (T, B, X)

    # Hoisted input projection for ALL timesteps (one big matmul), bias folded in.
    gates_x = (jnp.einsum('tbx,gx->tbg', x_tbx, w_ih,
                          preferred_element_type=jnp.float32)
               + (b_ih + b_hh)[None, None, :])                   # (T, B, 4H)

    whh_t = jnp.transpose(w_hh)                                  # (H, 4H)

    # Single kernel invocation; the only serial work (the recurrence) lives here.
    hs = pl.pallas_call(
        _lstm_recurrence_kernel,
        out_shape=jax.ShapeDtypeStruct((T, B, H), jnp.float32),
        grid_spec=pltpu.PrefetchScalarGridSpec(
            num_scalar_prefetch=0,
            grid=(1,),
            in_specs=[
                pl.BlockSpec((T, B, 4 * H), lambda i: (0, 0, 0)),   # gates_x (whole)
                pl.BlockSpec((H, 4 * H), lambda i: (0, 0)),         # W_hh^T  (whole)
            ],
            out_specs=pl.BlockSpec((T, B, H), lambda i: (0, 0, 0)),  # h states (whole)
        ),
        compiler_params=pltpu.CompilerParams(
            dimension_semantics=("arbitrary",),
        ),
    )(gates_x, whh_t)                                            # (T, B, H)

    # Hoisted fc: one batched (T*B, H) x (H, Y) matmul instead of T tiny ones.
    out = jnp.einsum('tbh,yh->tby', hs, w_fc,
                     preferred_element_type=jnp.float32) + b_fc  # (T, B, Y)
    return jnp.transpose(out, (1, 0, 2))                         # (B, T, Y)


def lstm_model_reference(x, params):
    """Pure-JAX reference matching PyTorch nn.LSTM + nn.Linear semantics."""
    w_ih, w_hh, b_ih, b_hh, w_fc, b_fc = params
    B, T, X = x.shape
    H = w_hh.shape[1]

    def step(carry, x_t):
        h, c = carry
        gates = x_t @ w_ih.T + b_ih + h @ w_hh.T + b_hh
        i = jax.nn.sigmoid(gates[:, 0 * H:1 * H])
        f = jax.nn.sigmoid(gates[:, 1 * H:2 * H])
        g = jnp.tanh(gates[:, 2 * H:3 * H])
        o = jax.nn.sigmoid(gates[:, 3 * H:4 * H])
        c_new = f * c + i * g
        h_new = o * jnp.tanh(c_new)
        return (h_new, c_new), h_new

    h0 = jnp.zeros((B, H), jnp.float32)
    c0 = jnp.zeros((B, H), jnp.float32)
    _, hs = lax.scan(step, (h0, c0), jnp.transpose(x, (1, 0, 2)))  # (T, B, H)
    out = jnp.einsum('tbh,yh->tby', hs, w_fc) + b_fc
    return jnp.transpose(out, (1, 0, 2))


def init_params(key, x_size, hidden, y_size):
    """Deterministic init mimicking PyTorch default uniform(-1/sqrt(H), 1/sqrt(H))."""
    ks = jax.random.split(key, 6)
    s = 1.0 / jnp.sqrt(hidden)
    w_ih = jax.random.uniform(ks[0], (4 * hidden, x_size), jnp.float32, -s, s)
    w_hh = jax.random.uniform(ks[1], (4 * hidden, hidden), jnp.float32, -s, s)
    b_ih = jax.random.uniform(ks[2], (4 * hidden,), jnp.float32, -s, s)
    b_hh = jax.random.uniform(ks[3], (4 * hidden,), jnp.float32, -s, s)
    w_fc = jax.random.uniform(ks[4], (y_size, hidden), jnp.float32, -s, s)
    b_fc = jax.random.uniform(ks[5], (y_size,), jnp.float32, -s, s)
    return (w_ih, w_hh, b_ih, b_hh, w_fc, b_fc)


if __name__ == "__main__":
    key = jax.random.PRNGKey(0)
    k_x, k_p = jax.random.split(key)

    B, T, X, H, Y = 2, 8, 16, 32, 8
    x = jax.random.normal(k_x, (B, T, X), jnp.float32)
    params = init_params(k_p, X, H, Y)

    fwd = jax.jit(lstm_model_forward)
    out = jax.block_until_ready(fwd(x, params))

    ref = lstm_model_reference(x, params)
    assert out.shape == (B, T, Y)
    assert jnp.allclose(out, ref, atol=1e-5, rtol=1e-5), "mismatch vs reference"

    print("KERNEL_OK")
</pallas_src>

<mosaic_0001>
module attributes {stable_mosaic.version = 11 : i64} {
  func.func @_lstm_recurrence_kernel(%arg0: i32, %arg1: memref<8x2x128xf32, #tpu.memory_space<vmem>>, %arg2: memref<32x128xf32, #tpu.memory_space<vmem>>, %arg3: memref<8x2x32xf32, #tpu.memory_space<vmem>>) attributes {dimension_semantics = [#tpu.dimension_semantics<arbitrary>], iteration_bounds = array<i64: 1>, scalar_prefetch = 0 : i64, scratch_operands = 0 : i64, tpu.core_type = #tpu.core_type<tc>, window_params = [{pipeline_mode = #tpu.pipeline_mode<synchronous>, transform_indices = @transform_0, window_bounds = array<i64: 8, 2, 128>}, {pipeline_mode = #tpu.pipeline_mode<synchronous>, transform_indices = @transform_1, window_bounds = array<i64: 32, 128>}, {pipeline_mode = #tpu.pipeline_mode<synchronous>, transform_indices = @transform_2, window_bounds = array<i64: 8, 2, 32>}]} {
    %c0 = arith.constant 0 : index
    %c0_0 = arith.constant 0 : index
    %0 = vector.load %arg2[%c0, %c0_0] : memref<32x128xf32, #tpu.memory_space<vmem>>, vector<32x128xf32>
    %cst = arith.constant 0.000000e+00 : f32
    %1 = vector.broadcast %cst : f32 to vector<2x32xf32>
    %cst_1 = arith.constant 0.000000e+00 : f32
    %2 = vector.broadcast %cst_1 : f32 to vector<2x32xf32>
    %c0_i32 = arith.constant 0 : i32
    %3 = arith.index_cast %c0_i32 : i32 to index
    %c0_2 = arith.constant 0 : index
    %c0_3 = arith.constant 0 : index
    %4 = vector.load %arg1[%3, %c0_2, %c0_3] : memref<8x2x128xf32, #tpu.memory_space<vmem>>, vector<1x2x128xf32>
    %5 = vector.shape_cast %4 : vector<1x2x128xf32> to vector<2x128xf32>
    %cst_4 = arith.constant dense<0.000000e+00> : vector<2x128xf32>
    %6 = tpu.matmul %1, %0, %cst_4 {dimension_numbers = #tpu.dot_dimension_numbers<[1], [0], [0], [1], [0, 0, 1, 1], [], []>} : vector<2x32xf32>, vector<32x128xf32>, vector<2x128xf32> -> vector<2x128xf32>
    %7 = arith.addf %5, %6 : vector<2x128xf32>
    %8 = vector.extract_strided_slice %7 {offsets = [0, 0], sizes = [2, 32], strides = [1, 1]} : vector<2x128xf32> to vector<2x32xf32>
    %9 = arith.negf %8 : vector<2x32xf32>
    %10 = math.exp %9 : vector<2x32xf32>
    %cst_5 = arith.constant 1.000000e+00 : f32
    %11 = vector.broadcast %cst_5 : f32 to vector<2x32xf32>
    %12 = arith.addf %11, %10 : vector<2x32xf32>
    %13 = arith.divf %11, %12 : vector<2x32xf32>
    %14 = vector.extract_strided_slice %7 {offsets = [0, 32], sizes = [2, 32], strides = [1, 1]} : vector<2x128xf32> to vector<2x32xf32>
    %15 = arith.negf %14 : vector<2x32xf32>
    %16 = math.exp %15 : vector<2x32xf32>
    %cst_6 = arith.constant 1.000000e+00 : f32
    %17 = vector.broadcast %cst_6 : f32 to vector<2x32xf32>
    %18 = arith.addf %17, %16 : vector<2x32xf32>
    %19 = arith.divf %17, %18 : vector<2x32xf32>
    %20 = vector.extract_strided_slice %7 {offsets = [0, 64], sizes = [2, 32], strides = [1, 1]} : vector<2x128xf32> to vector<2x32xf32>
    %21 = math.tanh %20 : vector<2x32xf32>
    %22 = vector.extract_strided_slice %7 {offsets = [0, 96], sizes = [2, 32], strides = [1, 1]} : vector<2x128xf32> to vector<2x32xf32>
    %23 = arith.negf %22 : vector<2x32xf32>
    %24 = math.exp %23 : vector<2x32xf32>
    %cst_7 = arith.constant 1.000000e+00 : f32
    %25 = vector.broadcast %cst_7 : f32 to vector<2x32xf32>
    %26 = arith.addf %25, %24 : vector<2x32xf32>
    %27 = arith.divf %25, %26 : vector<2x32xf32>
    %28 = arith.mulf %19, %2 : vector<2x32xf32>
    %29 = arith.mulf %13, %21 : vector<2x32xf32>
    %30 = arith.addf %28, %29 : vector<2x32xf32>
    %31 = math.tanh %30 : vector<2x32xf32>
    %32 = arith.mulf %27, %31 : vector<2x32xf32>
    %33 = arith.index_cast %c0_i32 : i32 to index
    %c0_8 = arith.constant 0 : index
    %c0_9 = arith.constant 0 : index
    %34 = vector.load %arg3[%33, %c0_8, %c0_9] : memref<8x2x32xf32, #tpu.memory_space<vmem>>, vector<1x2x32xf32>
    %35 = vector.shape_cast %34 : vector<1x2x32xf32> to vector<2x32xf32>
    %36 = vector.shape_cast %32 : vector<2x32xf32> to vector<1x2x32xf32>
    tpu.vector_store %arg3[%33, %c0_8, %c0_9], %36 {strides = array<i32>} : memref<8x2x32xf32, #tpu.memory_space<vmem>>, vector<1x2x32xf32>,
    %c1_i32 = arith.constant 1 : i32
    %37 = arith.index_cast %c1_i32 : i32 to index
    %c0_10 = arith.constant 0 : index
    %c0_11 = arith.constant 0 : index
    %38 = vector.load %arg1[%37, %c0_10, %c0_11] : memref<8x2x128xf32, #tpu.memory_space<vmem>>, vector<1x2x128xf32>
    %39 = vector.shape_cast %38 : vector<1x2x128xf32> to vector<2x128xf32>
    %cst_12 = arith.constant dense<0.000000e+00> : vector<2x128xf32>
    %40 = tpu.matmul %32, %0, %cst_12 {dimension_numbers = #tpu.dot_dimension_numbers<[1], [0], [0], [1], [0, 0, 1, 1], [], []>} : vector<2x32xf32>, vector<32x128xf32>, vector<2x128xf32> -> vector<2x128xf32>
    %41 = arith.addf %39, %40 : vector<2x128xf32>
    %42 = vector.extract_strided_slice %41 {offsets = [0, 0], sizes = [2, 32], strides = [1, 1]} : vector<2x128xf32> to vector<2x32xf32>
    %43 = arith.negf %42 : vector<2x32xf32>
    %44 = math.exp %43 : vector<2x32xf32>
    %cst_13 = arith.constant 1.000000e+00 : f32
    %45 = vector.broadcast %cst_13 : f32 to vector<2x32xf32>
    %46 = arith.addf %45, %44 : vector<2x32xf32>
    %47 = arith.divf %45, %46 : vector<2x32xf32>
    %48 = vector.extract_strided_slice %41 {offsets = [0, 32], sizes = [2, 32], strides = [1, 1]} : vector<2x128xf32> to vector<2x32xf32>
    %49 = arith.negf %48 : vector<2x32xf32>
    %50 = math.exp %49 : vector<2x32xf32>
    %cst_14 = arith.constant 1.000000e+00 : f32
    %51 = vector.broadcast %cst_14 : f32 to vector<2x32xf32>
    %52 = arith.addf %51, %50 : vector<2x32xf32>
    %53 = arith.divf %51, %52 : vector<2x32xf32>
    %54 = vector.extract_strided_slice %41 {offsets = [0, 64], sizes = [2, 32], strides = [1, 1]} : vector<2x128xf32> to vector<2x32xf32>
    %55 = math.tanh %54 : vector<2x32xf32>
    %56 = vector.extract_strided_slice %41 {offsets = [0, 96], sizes = [2, 32], strides = [1, 1]} : vector<2x128xf32> to vector<2x32xf32>
    %57 = arith.negf %56 : vector<2x32xf32>
    %58 = math.exp %57 : vector<2x32xf32>
    %cst_15 = arith.constant 1.000000e+00 : f32
    %59 = vector.broadcast %cst_15 : f32 to vector<2x32xf32>
    %60 = arith.addf %59, %58 : vector<2x32xf32>
    %61 = arith.divf %59, %60 : vector<2x32xf32>
    %62 = arith.mulf %53, %30 : vector<2x32xf32>
    %63 = arith.mulf %47, %55 : vector<2x32xf32>
    %64 = arith.addf %62, %63 : vector<2x32xf32>
    %65 = math.tanh %64 : vector<2x32xf32>
    %66 = arith.mulf %61, %65 : vector<2x32xf32>
    %67 = arith.index_cast %c1_i32 : i32 to index
    %c0_16 = arith.constant 0 : index
    %c0_17 = arith.constant 0 : index
    %68 = vector.load %arg3[%67, %c0_16, %c0_17] : memref<8x2x32xf32, #tpu.memory_space<vmem>>, vector<1x2x32xf32>
    %69 = vector.shape_cast %68 : vector<1x2x32xf32> to vector<2x32xf32>
    %70 = vector.shape_cast %66 : vector<2x32xf32> to vector<1x2x32xf32>
    tpu.vector_store %arg3[%67, %c0_16, %c0_17], %70 {strides = array<i32>} : memref<8x2x32xf32, #tpu.memory_space<vmem>>, vector<1x2x32xf32>,
    %c2_i32 = arith.constant 2 : i32
    %71 = arith.index_cast %c2_i32 : i32 to index
    %c0_18 = arith.constant 0 : index
    %c0_19 = arith.constant 0 : index
    %72 = vector.load %arg1[%71, %c0_18, %c0_19] : memref<8x2x128xf32, #tpu.memory_space<vmem>>, vector<1x2x128xf32>
    %73 = vector.shape_cast %72 : vector<1x2x128xf32> to vector<2x128xf32>
    %cst_20 = arith.constant dense<0.000000e+00> : vector<2x128xf32>
    %74 = tpu.matmul %66, %0, %cst_20 {dimension_numbers = #tpu.dot_dimension_numbers<[1], [0], [0], [1], [0, 0, 1, 1], [], []>} : vector<2x32xf32>, vector<32x128xf32>, vector<2x128xf32> -> vector<2x128xf32>
    %75 = arith.addf %73, %74 : vector<2x128xf32>
    %76 = vector.extract_strided_slice %75 {offsets = [0, 0], sizes = [2, 32], strides = [1, 1]} : vector<2x128xf32> to vector<2x32xf32>
    %77 = arith.negf %76 : vector<2x32xf32>
    %78 = math.exp %77 : vector<2x32xf32>
    %cst_21 = arith.constant 1.000000e+00 : f32
    %79 = vector.broadcast %cst_21 : f32 to vector<2x32xf32>
    %80 = arith.addf %79, %78 : vector<2x32xf32>
    %81 = arith.divf %79, %80 : vector<2x32xf32>
    %82 = vector.extract_strided_slice %75 {offsets = [0, 32], sizes = [2, 32], strides = [1, 1]} : vector<2x128xf32> to vector<2x32xf32>
    %83 = arith.negf %82 : vector<2x32xf32>
    %84 = math.exp %83 : vector<2x32xf32>
    %cst_22 = arith.constant 1.000000e+00 : f32
    %85 = vector.broadcast %cst_22 : f32 to vector<2x32xf32>
    %86 = arith.addf %85, %84 : vector<2x32xf32>
    %87 = arith.divf %85, %86 : vector<2x32xf32>
    %88 = vector.extract_strided_slice %75 {offsets = [0, 64], sizes = [2, 32], strides = [1, 1]} : vector<2x128xf32> to vector<2x32xf32>
    %89 = math.tanh %88 : vector<2x32xf32>
    %90 = vector.extract_strided_slice %75 {offsets = [0, 96], sizes = [2, 32], strides = [1, 1]} : vector<2x128xf32> to vector<2x32xf32>
    %91 = arith.negf %90 : vector<2x32xf32>
    %92 = math.exp %91 : vector<2x32xf32>
    %cst_23 = arith.constant 1.000000e+00 : f32
    %93 = vector.broadcast %cst_23 : f32 to vector<2x32xf32>
    %94 = arith.addf %93, %92 : vector<2x32xf32>
    %95 = arith.divf %93, %94 : vector<2x32xf32>
    %96 = arith.mulf %87, %64 : vector<2x32xf32>
    %97 = arith.mulf %81, %89 : vector<2x32xf32>
    %98 = arith.addf %96, %97 : vector<2x32xf32>
    %99 = math.tanh %98 : vector<2x32xf32>
    %100 = arith.mulf %95, %99 : vector<2x32xf32>
    %101 = arith.index_cast %c2_i32 : i32 to index
    %c0_24 = arith.constant 0 : index
    %c0_25 = arith.constant 0 : index
    %102 = vector.load %arg3[%101, %c0_24, %c0_25] : memref<8x2x32xf32, #tpu.memory_space<vmem>>, vector<1x2x32xf32>
    %103 = vector.shape_cast %102 : vector<1x2x32xf32> to vector<2x32xf32>
    %104 = vector.shape_cast %100 : vector<2x32xf32> to vector<1x2x32xf32>
    tpu.vector_store %arg3[%101, %c0_24, %c0_25], %104 {strides = array<i32>} : memref<8x2x32xf32, #tpu.memory_space<vmem>>, vector<1x2x32xf32>,
    %c3_i32 = arith.constant 3 : i32
    %105 = arith.index_cast %c3_i32 : i32 to index
    %c0_26 = arith.constant 0 : index
    %c0_27 = arith.constant 0 : index
    %106 = vector.load %arg1[%105, %c0_26, %c0_27] : memref<8x2x128xf32, #tpu.memory_space<vmem>>, vector<1x2x128xf32>
    %107 = vector.shape_cast %106 : vector<1x2x128xf32> to vector<2x128xf32>
    %cst_28 = arith.constant dense<0.000000e+00> : vector<2x128xf32>
    %108 = tpu.matmul %100, %0, %cst_28 {dimension_numbers = #tpu.dot_dimension_numbers<[1], [0], [0], [1], [0, 0, 1, 1], [], []>} : vector<2x32xf32>, vector<32x128xf32>, vector<2x128xf32> -> vector<2x128xf32>
    %109 = arith.addf %107, %108 : vector<2x128xf32>
    %110 = vector.extract_strided_slice %109 {offsets = [0, 0], sizes = [2, 32], strides = [1, 1]} : vector<2x128xf32> to vector<2x32xf32>
    %111 = arith.negf %110 : vector<2x32xf32>
    %112 = math.exp %111 : vector<2x32xf32>
    %cst_29 = arith.constant 1.000000e+00 : f32
    %113 = vector.broadcast %cst_29 : f32 to vector<2x32xf32>
    %114 = arith.addf %113, %112 : vector<2x32xf32>
    %115 = arith.divf %113, %114 : vector<2x32xf32>
    %116 = vector.extract_strided_slice %109 {offsets = [0, 32], sizes = [2, 32], strides = [1, 1]} : vector<2x128xf32> to vector<2x32xf32>
    %117 = arith.negf %116 : vector<2x32xf32>
    %118 = math.exp %117 : vector<2x32xf32>
    %cst_30 = arith.constant 1.000000e+00 : f32
    %119 = vector.broadcast %cst_30 : f32 to vector<2x32xf32>
    %120 = arith.addf %119, %118 : vector<2x32xf32>
    %121 = arith.divf %119, %120 : vector<2x32xf32>
    %122 = vector.extract_strided_slice %109 {offsets = [0, 64], sizes = [2, 32], strides = [1, 1]} : vector<2x128xf32> to vector<2x32xf32>
    %123 = math.tanh %122 : vector<2x32xf32>
    %124 = vector.extract_strided_slice %109 {offsets = [0, 96], sizes = [2, 32], strides = [1, 1]} : vector<2x128xf32> to vector<2x32xf32>
    %125 = arith.negf %124 : vector<2x32xf32>
    %126 = math.exp %125 : vector<2x32xf32>
    %cst_31 = arith.constant 1.000000e+00 : f32
    %127 = vector.broadcast %cst_31 : f32 to vector<2x32xf32>
    %128 = arith.addf %127, %126 : vector<2x32xf32>
    %129 = arith.divf %127, %128 : vector<2x32xf32>
    %130 = arith.mulf %121, %98 : vector<2x32xf32>
    %131 = arith.mulf %115, %123 : vector<2x32xf32>
    %132 = arith.addf %130, %131 : vector<2x32xf32>
    %133 = math.tanh %132 : vector<2x32xf32>
    %134 = arith.mulf %129, %133 : vector<2x32xf32>
    %135 = arith.index_cast %c3_i32 : i32 to index
    %c0_32 = arith.constant 0 : index
    %c0_33 = arith.constant 0 : index
    %136 = vector.load %arg3[%135, %c0_32, %c0_33] : memref<8x2x32xf32, #tpu.memory_space<vmem>>, vector<1x2x32xf32>
    %137 = vector.shape_cast %136 : vector<1x2x32xf32> to vector<2x32xf32>
    %138 = vector.shape_cast %134 : vector<2x32xf32> to vector<1x2x32xf32>
    tpu.vector_store %arg3[%135, %c0_32, %c0_33], %138 {strides = array<i32>} : memref<8x2x32xf32, #tpu.memory_space<vmem>>, vector<1x2x32xf32>,
    %c4_i32 = arith.constant 4 : i32
    %139 = arith.index_cast %c4_i32 : i32 to index
    %c0_34 = arith.constant 0 : index
    %c0_35 = arith.constant 0 : index
    %140 = vector.load %arg1[%139, %c0_34, %c0_35] : memref<8x2x128xf32, #tpu.memory_space<vmem>>, vector<1x2x128xf32>
    %141 = vector.shape_cast %140 : vector<1x2x128xf32> to vector<2x128xf32>
    %cst_36 = arith.constant dense<0.000000e+00> : vector<2x128xf32>
    %142 = tpu.matmul %134, %0, %cst_36 {dimension_numbers = #tpu.dot_dimension_numbers<[1], [0], [0], [1], [0, 0, 1, 1], [], []>} : vector<2x32xf32>, vector<32x128xf32>, vector<2x128xf32> -> vector<2x128xf32>
    %143 = arith.addf %141, %142 : vector<2x128xf32>
    %144 = vector.extract_strided_slice %143 {offsets = [0, 0], sizes = [2, 32], strides = [1, 1]} : vector<2x128xf32> to vector<2x32xf32>
    %145 = arith.negf %144 : vector<2x32xf32>
    %146 = math.exp %145 : vector<2x32xf32>
    %cst_37 = arith.constant 1.000000e+00 : f32
    %147 = vector.broadcast %cst_37 : f32 to vector<2x32xf32>
    %148 = arith.addf %147, %146 : vector<2x32xf32>
    %149 = arith.divf %147, %148 : vector<2x32xf32>
    %150 = vector.extract_strided_slice %143 {offsets = [0, 32], sizes = [2, 32], strides = [1, 1]} : vector<2x128xf32> to vector<2x32xf32>
    %151 = arith.negf %150 : vector<2x32xf32>
    %152 = math.exp %151 : vector<2x32xf32>
    %cst_38 = arith.constant 1.000000e+00 : f32
    %153 = vector.broadcast %cst_38 : f32 to vector<2x32xf32>
    %154 = arith.addf %153, %152 : vector<2x32xf32>
    %155 = arith.divf %153, %154 : vector<2x32xf32>
    %156 = vector.extract_strided_slice %143 {offsets = [0, 64], sizes = [2, 32], strides = [1, 1]} : vector<2x128xf32> to vector<2x32xf32>
    %157 = math.tanh %156 : vector<2x32xf32>
    %158 = vector.extract_strided_slice %143 {offsets = [0, 96], sizes = [2, 32], strides = [1, 1]} : vector<2x128xf32> to vector<2x32xf32>
    %159 = arith.negf %158 : vector<2x32xf32>
    %160 = math.exp %159 : vector<2x32xf32>
    %cst_39 = arith.constant 1.000000e+00 : f32
    %161 = vector.broadcast %cst_39 : f32 to vector<2x32xf32>
    %162 = arith.addf %161, %160 : vector<2x32xf32>
    %163 = arith.divf %161, %162 : vector<2x32xf32>
    %164 = arith.mulf %155, %132 : vector<2x32xf32>
    %165 = arith.mulf %149, %157 : vector<2x32xf32>
    %166 = arith.addf %164, %165 : vector<2x32xf32>
    %167 = math.tanh %166 : vector<2x32xf32>
    %168 = arith.mulf %163, %167 : vector<2x32xf32>
    %169 = arith.index_cast %c4_i32 : i32 to index
    %c0_40 = arith.constant 0 : index
    %c0_41 = arith.constant 0 : index
    %170 = vector.load %arg3[%169, %c0_40, %c0_41] : memref<8x2x32xf32, #tpu.memory_space<vmem>>, vector<1x2x32xf32>
    %171 = vector.shape_cast %170 : vector<1x2x32xf32> to vector<2x32xf32>
    %172 = vector.shape_cast %168 : vector<2x32xf32> to vector<1x2x32xf32>
    tpu.vector_store %arg3[%169, %c0_40, %c0_41], %172 {strides = array<i32>} : memref<8x2x32xf32, #tpu.memory_space<vmem>>, vector<1x2x32xf32>,
    %c5_i32 = arith.constant 5 : i32
    %173 = arith.index_cast %c5_i32 : i32 to index
    %c0_42 = arith.constant 0 : index
    %c0_43 = arith.constant 0 : index
    %174 = vector.load %arg1[%173, %c0_42, %c0_43] : memref<8x2x128xf32, #tpu.memory_space<vmem>>, vector<1x2x128xf32>
    %175 = vector.shape_cast %174 : vector<1x2x128xf32> to vector<2x128xf32>
    %cst_44 = arith.constant dense<0.000000e+00> : vector<2x128xf32>
    %176 = tpu.matmul %168, %0, %cst_44 {dimension_numbers = #tpu.dot_dimension_numbers<[1], [0], [0], [1], [0, 0, 1, 1], [], []>} : vector<2x32xf32>, vector<32x128xf32>, vector<2x128xf32> -> vector<2x128xf32>
    %177 = arith.addf %175, %176 : vector<2x128xf32>
    %178 = vector.extract_strided_slice %177 {offsets = [0, 0], sizes = [2, 32], strides = [1, 1]} : vector<2x128xf32> to vector<2x32xf32>
    %179 = arith.negf %178 : vector<2x32xf32>
    %180 = math.exp %179 : vector<2x32xf32>
    %cst_45 = arith.constant 1.000000e+00 : f32
    %181 = vector.broadcast %cst_45 : f32 to vector<2x32xf32>
    %182 = arith.addf %181, %180 : vector<2x32xf32>
    %183 = arith.divf %181, %182 : vector<2x32xf32>
    %184 = vector.extract_strided_slice %177 {offsets = [0, 32], sizes = [2, 32], strides = [1, 1]} : vector<2x128xf32> to vector<2x32xf32>
    %185 = arith.negf %184 : vector<2x32xf32>
    %186 = math.exp %185 : vector<2x32xf32>
    %cst_46 = arith.constant 1.000000e+00 : f32
    %187 = vector.broadcast %cst_46 : f32 to vector<2x32xf32>
    %188 = arith.addf %187, %186 : vector<2x32xf32>
    %189 = arith.divf %187, %188 : vector<2x32xf32>
    %190 = vector.extract_strided_slice %177 {offsets = [0, 64], sizes = [2, 32], strides = [1, 1]} : vector<2x128xf32> to vector<2x32xf32>
    %191 = math.tanh %190 : vector<2x32xf32>
    %192 = vector.extract_strided_slice %177 {offsets = [0, 96], sizes = [2, 32], strides = [1, 1]} : vector<2x128xf32> to vector<2x32xf32>
    %193 = arith.negf %192 : vector<2x32xf32>
    %194 = math.exp %193 : vector<2x32xf32>
    %cst_47 = arith.constant 1.000000e+00 : f32
    %195 = vector.broadcast %cst_47 : f32 to vector<2x32xf32>
    %196 = arith.addf %195, %194 : vector<2x32xf32>
    %197 = arith.divf %195, %196 : vector<2x32xf32>
    %198 = arith.mulf %189, %166 : vector<2x32xf32>
    %199 = arith.mulf %183, %191 : vector<2x32xf32>
    %200 = arith.addf %198, %199 : vector<2x32xf32>
    %201 = math.tanh %200 : vector<2x32xf32>
    %202 = arith.mulf %197, %201 : vector<2x32xf32>
    %203 = arith.index_cast %c5_i32 : i32 to index
    %c0_48 = arith.constant 0 : index
    %c0_49 = arith.constant 0 : index
    %204 = vector.load %arg3[%203, %c0_48, %c0_49] : memref<8x2x32xf32, #tpu.memory_space<vmem>>, vector<1x2x32xf32>
    %205 = vector.shape_cast %204 : vector<1x2x32xf32> to vector<2x32xf32>
    %206 = vector.shape_cast %202 : vector<2x32xf32> to vector<1x2x32xf32>
    tpu.vector_store %arg3[%203, %c0_48, %c0_49], %206 {strides = array<i32>} : memref<8x2x32xf32, #tpu.memory_space<vmem>>, vector<1x2x32xf32>,
    %c6_i32 = arith.constant 6 : i32
    %207 = arith.index_cast %c6_i32 : i32 to index
    %c0_50 = arith.constant 0 : index
    %c0_51 = arith.constant 0 : index
    %208 = vector.load %arg1[%207, %c0_50, %c0_51] : memref<8x2x128xf32, #tpu.memory_space<vmem>>, vector<1x2x128xf32>
    %209 = vector.shape_cast %208 : vector<1x2x128xf32> to vector<2x128xf32>
    %cst_52 = arith.constant dense<0.000000e+00> : vector<2x128xf32>
    %210 = tpu.matmul %202, %0, %cst_52 {dimension_numbers = #tpu.dot_dimension_numbers<[1], [0], [0], [1], [0, 0, 1, 1], [], []>} : vector<2x32xf32>, vector<32x128xf32>, vector<2x128xf32> -> vector<2x128xf32>
    %211 = arith.addf %209, %210 : vector<2x128xf32>
    %212 = vector.extract_strided_slice %211 {offsets = [0, 0], sizes = [2, 32], strides = [1, 1]} : vector<2x128xf32> to vector<2x32xf32>
    %213 = arith.negf %212 : vector<2x32xf32>
    %214 = math.exp %213 : vector<2x32xf32>
    %cst_53 = arith.constant 1.000000e+00 : f32
    %215 = vector.broadcast %cst_53 : f32 to vector<2x32xf32>
    %216 = arith.addf %215, %214 : vector<2x32xf32>
    %217 = arith.divf %215, %216 : vector<2x32xf32>
    %218 = vector.extract_strided_slice %211 {offsets = [0, 32], sizes = [2, 32], strides = [1, 1]} : vector<2x128xf32> to vector<2x32xf32>
    %219 = arith.negf %218 : vector<2x32xf32>
    %220 = math.exp %219 : vector<2x32xf32>
    %cst_54 = arith.constant 1.000000e+00 : f32
    %221 = vector.broadcast %cst_54 : f32 to vector<2x32xf32>
    %222 = arith.addf %221, %220 : vector<2x32xf32>
    %223 = arith.divf %221, %222 : vector<2x32xf32>
    %224 = vector.extract_strided_slice %211 {offsets = [0, 64], sizes = [2, 32], strides = [1, 1]} : vector<2x128xf32> to vector<2x32xf32>
    %225 = math.tanh %224 : vector<2x32xf32>
    %226 = vector.extract_strided_slice %211 {offsets = [0, 96], sizes = [2, 32], strides = [1, 1]} : vector<2x128xf32> to vector<2x32xf32>
    %227 = arith.negf %226 : vector<2x32xf32>
    %228 = math.exp %227 : vector<2x32xf32>
    %cst_55 = arith.constant 1.000000e+00 : f32
    %229 = vector.broadcast %cst_55 : f32 to vector<2x32xf32>
    %230 = arith.addf %229, %228 : vector<2x32xf32>
    %231 = arith.divf %229, %230 : vector<2x32xf32>
    %232 = arith.mulf %223, %200 : vector<2x32xf32>
    %233 = arith.mulf %217, %225 : vector<2x32xf32>
    %234 = arith.addf %232, %233 : vector<2x32xf32>
    %235 = math.tanh %234 : vector<2x32xf32>
    %236 = arith.mulf %231, %235 : vector<2x32xf32>
    %237 = arith.index_cast %c6_i32 : i32 to index
    %c0_56 = arith.constant 0 : index
    %c0_57 = arith.constant 0 : index
    %238 = vector.load %arg3[%237, %c0_56, %c0_57] : memref<8x2x32xf32, #tpu.memory_space<vmem>>, vector<1x2x32xf32>
    %239 = vector.shape_cast %238 : vector<1x2x32xf32> to vector<2x32xf32>
    %240 = vector.shape_cast %236 : vector<2x32xf32> to vector<1x2x32xf32>
    tpu.vector_store %arg3[%237, %c0_56, %c0_57], %240 {strides = array<i32>} : memref<8x2x32xf32, #tpu.memory_space<vmem>>, vector<1x2x32xf32>,
    %c7_i32 = arith.constant 7 : i32
    %241 = arith.index_cast %c7_i32 : i32 to index
    %c0_58 = arith.constant 0 : index
    %c0_59 = arith.constant 0 : index
    %242 = vector.load %arg1[%241, %c0_58, %c0_59] : memref<8x2x128xf32, #tpu.memory_space<vmem>>, vector<1x2x128xf32>
    %243 = vector.shape_cast %242 : vector<1x2x128xf32> to vector<2x128xf32>
    %cst_60 = arith.constant dense<0.000000e+00> : vector<2x128xf32>
    %244 = tpu.matmul %236, %0, %cst_60 {dimension_numbers = #tpu.dot_dimension_numbers<[1], [0], [0], [1], [0, 0, 1, 1], [], []>} : vector<2x32xf32>, vector<32x128xf32>, vector<2x128xf32> -> vector<2x128xf32>
    %245 = arith.addf %243, %244 : vector<2x128xf32>
    %246 = vector.extract_strided_slice %245 {offsets = [0, 0], sizes = [2, 32], strides = [1, 1]} : vector<2x128xf32> to vector<2x32xf32>
    %247 = arith.negf %246 : vector<2x32xf32>
    %248 = math.exp %247 : vector<2x32xf32>
    %cst_61 = arith.constant 1.000000e+00 : f32
    %249 = vector.broadcast %cst_61 : f32 to vector<2x32xf32>
    %250 = arith.addf %249, %248 : vector<2x32xf32>
    %251 = arith.divf %249, %250 : vector<2x32xf32>
    %252 = vector.extract_strided_slice %245 {offsets = [0, 32], sizes = [2, 32], strides = [1, 1]} : vector<2x128xf32> to vector<2x32xf32>
    %253 = arith.negf %252 : vector<2x32xf32>
    %254 = math.exp %253 : vector<2x32xf32>
    %cst_62 = arith.constant 1.000000e+00 : f32
    %255 = vector.broadcast %cst_62 : f32 to vector<2x32xf32>
    %256 = arith.addf %255, %254 : vector<2x32xf32>
    %257 = arith.divf %255, %256 : vector<2x32xf32>
    %258 = vector.extract_strided_slice %245 {offsets = [0, 64], sizes = [2, 32], strides = [1, 1]} : vector<2x128xf32> to vector<2x32xf32>
    %259 = math.tanh %258 : vector<2x32xf32>
    %260 = vector.extract_strided_slice %245 {offsets = [0, 96], sizes = [2, 32], strides = [1, 1]} : vector<2x128xf32> to vector<2x32xf32>
    %261 = arith.negf %260 : vector<2x32xf32>
    %262 = math.exp %261 : vector<2x32xf32>
    %cst_63 = arith.constant 1.000000e+00 : f32
    %263 = vector.broadcast %cst_63 : f32 to vector<2x32xf32>
    %264 = arith.addf %263, %262 : vector<2x32xf32>
    %265 = arith.divf %263, %264 : vector<2x32xf32>
    %266 = arith.mulf %257, %234 : vector<2x32xf32>
    %267 = arith.mulf %251, %259 : vector<2x32xf32>
    %268 = arith.addf %266, %267 : vector<2x32xf32>
    %269 = math.tanh %268 : vector<2x32xf32>
    %270 = arith.mulf %265, %269 : vector<2x32xf32>
    %271 = arith.index_cast %c7_i32 : i32 to index
    %c0_64 = arith.constant 0 : index
    %c0_65 = arith.constant 0 : index
    %272 = vector.load %arg3[%271, %c0_64, %c0_65] : memref<8x2x32xf32, #tpu.memory_space<vmem>>, vector<1x2x32xf32>
    %273 = vector.shape_cast %272 : vector<1x2x32xf32> to vector<2x32xf32>
    %274 = vector.shape_cast %270 : vector<2x32xf32> to vector<1x2x32xf32>
    tpu.vector_store %arg3[%271, %c0_64, %c0_65], %274 {strides = array<i32>} : memref<8x2x32xf32, #tpu.memory_space<vmem>>, vector<1x2x32xf32>,
    %c8_i32 = arith.constant 8 : i32
    return
  }
  func.func @transform_0(%arg0: i32) -> (i32, i32, i32) {
    %c0_i32 = arith.constant 0 : i32
    %c0_i32_0 = arith.constant 0 : i32
    %c0_i32_1 = arith.constant 0 : i32
    %c0_i32_2 = arith.constant 0 : i32
    return %c0_i32, %c0_i32_0, %c0_i32_1 : i32, i32, i32
  }
  func.func @transform_1(%arg0: i32) -> (i32, i32) {
    %c0_i32 = arith.constant 0 : i32
    %c0_i32_0 = arith.constant 0 : i32
    %c0_i32_1 = arith.constant 0 : i32
    return %c0_i32, %c0_i32_0 : i32, i32
  }
  func.func @transform_2(%arg0: i32) -> (i32, i32, i32) {
    %c0_i32 = arith.constant 0 : i32
    %c0_i32_0 = arith.constant 0 : i32
    %c0_i32_1 = arith.constant 0 : i32
    %c0_i32_2 = arith.constant 0 : i32
    return %c0_i32, %c0_i32_0, %c0_i32_1 : i32, i32, i32
  }
}

</mosaic_0001>

<llo_original>
// kernel: lstm_model_forward.1
$region0: #{lstm_model_forward.1}
  #allocation0 [shape = 'u32[]', space=smem, size = 0x4, offset = 0x4, fixed_abs, tag = 'smem constant byte address 0x4 - core index']
  #allocation1 [shape = 'u32[144,128]{1,0:T(1,128)}', space=vmem, size = 0x12000, scoped, tag = 'internal scratch']
  %s0 = inlined_call_operand.vmem [shape: f32[8,2,128], index: 0, kind: input, shape index: {}]
  %s1 = inlined_call_operand.vmem [shape: f32[32,128], index: 1, kind: input, shape index: {}]
  %s2 = inlined_call_operand.vmem [shape: f32[8,2,32], index: 2, kind: output, shape index: {}]
  %s3 = sld [smem:[#allocation0]]
  $region18: #{lstm_model_forward.1} parent=0
    _
  %s5 = ssub.s32 1, %s3
  %s6 = scalar_select 0, %s5, %s3
  // Predicated region
  $region2: #{lstm_model_forward.1} parent=0 // pred_check
    _
  $region3: #{lstm_model_forward.1} parent=0 // pred_check_branch
    %8 = sbr.rel (0) target = $region5
  $region4: #{lstm_model_forward.1} parent=0 // pred_region
    _
  $region5: #{lstm_model_forward.1} parent=0 // pred_fallthru
    _
  // Predicated region
  $region6: #{lstm_model_forward.1} parent=0 // pred_check
    _
  $region7: #{lstm_model_forward.1} parent=0 // pred_check_branch
    %10 = sbr.rel (0) target = $region9
  $region8: #{lstm_model_forward.1} parent=0 // pred_region
    _
  $region9: #{lstm_model_forward.1} parent=0 // pred_fallthru
    _
  %v11 = vld [vmem:[%s1] sm:$0xff]
  %v12 = vld [vmem:[%s1 + $0x8] sm:$0xff]
  %v13 = vld [vmem:[%s1 + $0x10] sm:$0xff]
  %v14 = vld [vmem:[%s1 + $0x18] sm:$0xff]
  %v15 = vld [vmem:[%s0] sm:$0x3]
  %vm16 = vcmask 261120
  %v18 = vsel %vm16, 0.0, 0
  %20 = vmatprep.subr.mxu0 0.0
  %21 = vmatpush1.msra.mxu0 %v11
  %22 = vmatprep.subr.mxu0 0.0
  %23 = vmatpush1.msra.mxu0 %v12
  %24 = vmatprep.subr.mxu0 0.0
  %25 = vmatpush1.msra.mxu0 %v13
  %26 = vmatprep.subr.mxu0 0.0
  %27 = vmatpush1.msra.mxu0 %v14
  %28 = vmatprep.subr.mxu0 0.0
  %29 = vmatpush1.msra.mxu0 0.0
  %30 = vmatprep.subr.mxu0 0.0
  %31 = vmatpush1.msra.mxu0 0.0
  %32 = vmatprep.subr.mxu0 0.0
  %33 = vmatpush1.msra.mxu0 0.0
  %34 = vmatprep.subr.mxu0 0.0
  %35 = vmatpush1.msra.mxu0 0.0
  %36 = vmatprep.subr.mxu0 0.0
  %37 = vmatpush1.msra.mxu0 0.0
  %38 = vmatprep.subr.mxu0 0.0
  %39 = vmatpush1.msra.mxu0 0.0
  %40 = vmatprep.subr.mxu0 0.0
  %41 = vmatpush1.msra.mxu0 0.0
  %42 = vmatprep.subr.mxu0 0.0
  %43 = vmatpush1.msra.mxu0 0.0
  %44 = vmatprep.subr.mxu0 0.0
  %45 = vmatpush1.msra.mxu0 0.0
  %46 = vmatprep.subr.mxu0 0.0
  %47 = vmatpush1.msra.mxu0 0.0
  %48 = vmatprep.subr.mxu0 0.0
  %49 = vmatpush1.msra.mxu0 0.0
  %50 = vmatprep.subr.mxu0 0.0
  %51 = vmatpush1.msra.mxu0 0.0
  %52 = vmatprep.subr.mxu0 0.0
  %53 = vmatpush1.msra.mxu0 0.0
  %54 = vmatprep.subr.mxu0 0.0
  %55 = vmatpush1.msra.mxu0 0.0
  %56 = vmatprep.subr.mxu0 0.0
  %57 = vmatpush1.msra.mxu0 0.0
  %58 = vmatprep.subr.mxu0 0.0
  %59 = vmatpush1.msra.mxu0 0.0
  %60 = vmatprep.subr.mxu0 0.0
  %61 = vmatpush1.msra.mxu0 0.0
  %62 = vmatprep.subr.mxu0 0.0
  %63 = vmatpush1.msra.mxu0 0.0
  %64 = vmatprep.subr.mxu0 0.0
  %65 = vmatpush1.msra.mxu0 0.0
  %66 = vmatprep.subr.mxu0 0.0
  %67 = vmatpush1.msra.mxu0 0.0
  %68 = vmatprep.subr.mxu0 0.0
  %69 = vmatpush1.msra.mxu0 0.0
  %70 = vmatprep.subr.mxu0 0.0
  %71 = vmatpush1.msra.mxu0 0.0
  %72 = vmatprep.subr.mxu0 0.0
  %73 = vmatpush1.msra.mxu0 0.0
  %74 = vmatprep.subr.mxu0 0.0
  %75 = vmatpush1.msra.mxu0 0.0
  %76 = vmatprep.subr.mxu0 0.0
  %77 = vmatpush1.msra.mxu0 0.0
  %78 = vmatprep.subr.mxu0 0.0
  %79 = vmatpush1.msra.mxu0 0.0
  %80 = vmatprep.subr.mxu0 0.0
  %81 = vmatpush1.msra.mxu0 0.0
  %82 = vmatprep.subr.mxu0 0.0
  %83 = vmatpush1.msra.mxu0 0.0
  %84 = vmatprep.mubr.f32.mxu0 0.0
  %85 = vmatmul.mubr.f32.gmra.mrb[0].mxu0 %v18
  %v86 = vpop.f32.mrb[0].mxu0
  %v87 = vadd.f32 0.0, %v86
  %v88 = vpop.f32.mrb[0].mxu0
  %89 = vdwg.mxu0
  %v90 = vadd.f32 %v15, %v87
  %v91 = vxor.u32 %v90, 2147483648
  %v92 = vmul.f32 %v91, 1.442695
  %v93 = vpow.pop %v92
  %v94 = vadd.f32 %v93, 1.0
  %v95 = vrcp.pop %v94
  %v96 = vmul.f32 1.0, %v95
  %v97 = vtanh.pop %v90
  %v98 = vmul.f32 %v96, 0.0
  %100 = vrot.lane.b32.xlu0 %v97, 64
  %v101 = vpop.permute.xlu0 %100
  %v103 = vmul.f32 %v96, %v101
  %105 = vrot.lane.b32.xlu0 %v103, 32
  %v106 = vpop.permute.xlu0 %105
  %v108 = vadd.f32 %v98, %v106
  %v109 = vtanh.pop %v108
  %111 = vrot.lane.b32.xlu0 %v109, 64
  %v112 = vpop.permute.xlu0 %111
  %v114 = vmul.f32 %v96, %v112
  %116 = vrot.lane.b32.xlu0 %v114, 32
  %v117 = vpop.permute.xlu0 %116
  %vm119 = vcmask 254976
  %120 = vst.msk [vmem:[%s2] sm:$0x3] %vm119, %v117
  %s121 = scalar_lea.vmem %s0, 2
  %v122 = vld [vmem:[%s121] sm:$0x3]
  %v123 = vsel %vm16, %v117, 0
  %125 = vmatprep.subr.mxu0 0.0
  %126 = vmatpush1.msra.mxu0 %v11
  %127 = vmatprep.subr.mxu0 0.0
  %128 = vmatpush1.msra.mxu0 %v12
  %129 = vmatprep.subr.mxu0 0.0
  %130 = vmatpush1.msra.mxu0 %v13
  %131 = vmatprep.subr.mxu0 0.0
  %132 = vmatpush1.msra.mxu0 %v14
  %133 = vmatprep.subr.mxu0 0.0
  %134 = vmatpush1.msra.mxu0 0.0
  %135 = vmatprep.subr.mxu0 0.0
  %136 = vmatpush1.msra.mxu0 0.0
  %137 = vmatprep.subr.mxu0 0.0
  %138 = vmatpush1.msra.mxu0 0.0
  %139 = vmatprep.subr.mxu0 0.0
  %140 = vmatpush1.msra.mxu0 0.0
  %141 = vmatprep.subr.mxu0 0.0
  %142 = vmatpush1.msra.mxu0 0.0
  %143 = vmatprep.subr.mxu0 0.0
  %144 = vmatpush1.msra.mxu0 0.0
  %145 = vmatprep.subr.mxu0 0.0
  %146 = vmatpush1.msra.mxu0 0.0
  %147 = vmatprep.subr.mxu0 0.0
  %148 = vmatpush1.msra.mxu0 0.0
  %149 = vmatprep.subr.mxu0 0.0
  %150 = vmatpush1.msra.mxu0 0.0
  %151 = vmatprep.subr.mxu0 0.0
  %152 = vmatpush1.msra.mxu0 0.0
  %153 = vmatprep.subr.mxu0 0.0
  %154 = vmatpush1.msra.mxu0 0.0
  %155 = vmatprep.subr.mxu0 0.0
  %156 = vmatpush1.msra.mxu0 0.0
  %157 = vmatprep.subr.mxu0 0.0
  %158 = vmatpush1.msra.mxu0 0.0
  %159 = vmatprep.subr.mxu0 0.0
  %160 = vmatpush1.msra.mxu0 0.0
  %161 = vmatprep.subr.mxu0 0.0
  %162 = vmatpush1.msra.mxu0 0.0
  %163 = vmatprep.subr.mxu0 0.0
  %164 = vmatpush1.msra.mxu0 0.0
  %165 = vmatprep.subr.mxu0 0.0
  %166 = vmatpush1.msra.mxu0 0.0
  %167 = vmatprep.subr.mxu0 0.0
  %168 = vmatpush1.msra.mxu0 0.0
  %169 = vmatprep.subr.mxu0 0.0
  %170 = vmatpush1.msra.mxu0 0.0
  %171 = vmatprep.subr.mxu0 0.0
  %172 = vmatpush1.msra.mxu0 0.0
  %173 = vmatprep.subr.mxu0 0.0
  %174 = vmatpush1.msra.mxu0 0.0
  %175 = vmatprep.subr.mxu0 0.0
  %176 = vmatpush1.msra.mxu0 0.0
  %177 = vmatprep.subr.mxu0 0.0
  %178 = vmatpush1.msra.mxu0 0.0
  %179 = vmatprep.subr.mxu0 0.0
  %180 = vmatpush1.msra.mxu0 0.0
  %181 = vmatprep.subr.mxu0 0.0
  %182 = vmatpush1.msra.mxu0 0.0
  %183 = vmatprep.subr.mxu0 0.0
  %184 = vmatpush1.msra.mxu0 0.0
  %185 = vmatprep.subr.mxu0 0.0
  %186 = vmatpush1.msra.mxu0 0.0
  %187 = vmatprep.subr.mxu0 0.0
  %188 = vmatpush1.msra.mxu0 0.0
  %189 = vmatprep.mubr.f32.mxu0 0.0
  %190 = vmatmul.mubr.f32.gmra.mrb[0].mxu0 %v123
  %v191 = vpop.f32.mrb[0].mxu0
  %v192 = vadd.f32 0.0, %v191
  %v193 = vpop.f32.mrb[0].mxu0
  %194 = vdwg.mxu0
  %v195 = vadd.f32 %v122, %v192
  %v196 = vxor.u32 %v195, 2147483648
  %v197 = vmul.f32 %v196, 1.442695
  %v198 = vpow.pop %v197
  %v199 = vadd.f32 %v198, 1.0
  %v200 = vrcp.pop %v199
  %v201 = vmul.f32 1.0, %v200
  %v202 = vtanh.pop %v195
  %v203 = vmul.f32 %v201, %v108
  %205 = vrot.lane.b32.xlu0 %v202, 64
  %v206 = vpop.permute.xlu0 %205
  %v208 = vmul.f32 %v201, %v206
  %210 = vrot.lane.b32.xlu0 %v208, 32
  %v211 = vpop.permute.xlu0 %210
  %v213 = vadd.f32 %v203, %v211
  %v214 = vtanh.pop %v213
  %216 = vrot.lane.b32.xlu0 %v214, 64
  %v217 = vpop.permute.xlu0 %216
  %v219 = vmul.f32 %v201, %v217
  %221 = vrot.lane.b32.xlu0 %v219, 32
  %v222 = vpop.permute.xlu0 %221
  %s224 = scalar_lea.vmem %s2, 2
  %225 = vst.msk [vmem:[%s224] sm:$0x3] %vm119, %v222
  %s226 = scalar_lea.vmem %s0, 4
  %v227 = vld [vmem:[%s226] sm:$0x3]
  %v228 = vsel %vm16, %v222, 0
  %230 = vmatprep.subr.mxu0 0.0
  %231 = vmatpush1.msra.mxu0 %v11
  %232 = vmatprep.subr.mxu0 0.0
  %233 = vmatpush1.msra.mxu0 %v12
  %234 = vmatprep.subr.mxu0 0.0
  %235 = vmatpush1.msra.mxu0 %v13
  %236 = vmatprep.subr.mxu0 0.0
  %237 = vmatpush1.msra.mxu0 %v14
  %238 = vmatprep.subr.mxu0 0.0
  %239 = vmatpush1.msra.mxu0 0.0
  %240 = vmatprep.subr.mxu0 0.0
  %241 = vmatpush1.msra.mxu0 0.0
  %242 = vmatprep.subr.mxu0 0.0
  %243 = vmatpush1.msra.mxu0 0.0
  %244 = vmatprep.subr.mxu0 0.0
  %245 = vmatpush1.msra.mxu0 0.0
  %246 = vmatprep.subr.mxu0 0.0
  %247 = vmatpush1.msra.mxu0 0.0
  %248 = vmatprep.subr.mxu0 0.0
  %249 = vmatpush1.msra.mxu0 0.0
  %250 = vmatprep.subr.mxu0 0.0
  %251 = vmatpush1.msra.mxu0 0.0
  %252 = vmatprep.subr.mxu0 0.0
  %253 = vmatpush1.msra.mxu0 0.0
  %254 = vmatprep.subr.mxu0 0.0
  %255 = vmatpush1.msra.mxu0 0.0
  %256 = vmatprep.subr.mxu0 0.0
  %257 = vmatpush1.msra.mxu0 0.0
  %258 = vmatprep.subr.mxu0 0.0
  %259 = vmatpush1.msra.mxu0 0.0
  %260 = vmatprep.subr.mxu0 0.0
  %261 = vmatpush1.msra.mxu0 0.0
  %262 = vmatprep.subr.mxu0 0.0
  %263 = vmatpush1.msra.mxu0 0.0
  %264 = vmatprep.subr.mxu0 0.0
  %265 = vmatpush1.msra.mxu0 0.0
  %266 = vmatprep.subr.mxu0 0.0
  %267 = vmatpush1.msra.mxu0 0.0
  %268 = vmatprep.subr.mxu0 0.0
  %269 = vmatpush1.msra.mxu0 0.0
  %270 = vmatprep.subr.mxu0 0.0
  %271 = vmatpush1.msra.mxu0 0.0
  %272 = vmatprep.subr.mxu0 0.0
  %273 = vmatpush1.msra.mxu0 0.0
  %274 = vmatprep.subr.mxu0 0.0
  %275 = vmatpush1.msra.mxu0 0.0
  %276 = vmatprep.subr.mxu0 0.0
  %277 = vmatpush1.msra.mxu0 0.0
  %278 = vmatprep.subr.mxu0 0.0
  %279 = vmatpush1.msra.mxu0 0.0
  %280 = vmatprep.subr.mxu0 0.0
  %281 = vmatpush1.msra.mxu0 0.0
  %282 = vmatprep.subr.mxu0 0.0
  %283 = vmatpush1.msra.mxu0 0.0
  %284 = vmatprep.subr.mxu0 0.0
  %285 = vmatpush1.msra.mxu0 0.0
  %286 = vmatprep.subr.mxu0 0.0
  %287 = vmatpush1.msra.mxu0 0.0
  %288 = vmatprep.subr.mxu0 0.0
  %289 = vmatpush1.msra.mxu0 0.0
  %290 = vmatprep.subr.mxu0 0.0
  %291 = vmatpush1.msra.mxu0 0.0
  %292 = vmatprep.subr.mxu0 0.0
  %293 = vmatpush1.msra.mxu0 0.0
  %294 = vmatprep.mubr.f32.mxu0 0.0
  %295 = vmatmul.mubr.f32.gmra.mrb[0].mxu0 %v228
  %v296 = vpop.f32.mrb[0].mxu0
  %v297 = vadd.f32 0.0, %v296
  %v298 = vpop.f32.mrb[0].mxu0
  %299 = vdwg.mxu0
  %v300 = vadd.f32 %v227, %v297
  %v301 = vxor.u32 %v300, 2147483648
  %v302 = vmul.f32 %v301, 1.442695
  %v303 = vpow.pop %v302
  %v304 = vadd.f32 %v303, 1.0
  %v305 = vrcp.pop %v304
  %v306 = vmul.f32 1.0, %v305
  %v307 = vtanh.pop %v300
  %v308 = vmul.f32 %v306, %v213
  %310 = vrot.lane.b32.xlu0 %v307, 64
  %v311 = vpop.permute.xlu0 %310
  %v313 = vmul.f32 %v306, %v311
  %315 = vrot.lane.b32.xlu0 %v313, 32
  %v316 = vpop.permute.xlu0 %315
  %v318 = vadd.f32 %v308, %v316
  %v319 = vtanh.pop %v318
  %321 = vrot.lane.b32.xlu0 %v319, 64
  %v322 = vpop.permute.xlu0 %321
  %v324 = vmul.f32 %v306, %v322
  %326 = vrot.lane.b32.xlu0 %v324, 32
  %v327 = vpop.permute.xlu0 %326
  %s329 = scalar_lea.vmem %s2, 4
  %330 = vst.msk [vmem:[%s329] sm:$0x3] %vm119, %v327
  %s331 = scalar_lea.vmem %s0, 6
  %v332 = vld [vmem:[%s331] sm:$0x3]
  %v333 = vsel %vm16, %v327, 0
  %335 = vmatprep.subr.mxu0 0.0
  %336 = vmatpush1.msra.mxu0 %v11
  %337 = vmatprep.subr.mxu0 0.0
  %338 = vmatpush1.msra.mxu0 %v12
  %339 = vmatprep.subr.mxu0 0.0
  %340 = vmatpush1.msra.mxu0 %v13
  %341 = vmatprep.subr.mxu0 0.0
  %342 = vmatpush1.msra.mxu0 %v14
  %343 = vmatprep.subr.mxu0 0.0
  %344 = vmatpush1.msra.mxu0 0.0
  %345 = vmatprep.subr.mxu0 0.0
  %346 = vmatpush1.msra.mxu0 0.0
  %347 = vmatprep.subr.mxu0 0.0
  %348 = vmatpush1.msra.mxu0 0.0
  %349 = vmatprep.subr.mxu0 0.0
  %350 = vmatpush1.msra.mxu0 0.0
  %351 = vmatprep.subr.mxu0 0.0
  %352 = vmatpush1.msra.mxu0 0.0
  %353 = vmatprep.subr.mxu0 0.0
  %354 = vmatpush1.msra.mxu0 0.0
  %355 = vmatprep.subr.mxu0 0.0
  %356 = vmatpush1.msra.mxu0 0.0
  %357 = vmatprep.subr.mxu0 0.0
  %358 = vmatpush1.msra.mxu0 0.0
  %359 = vmatprep.subr.mxu0 0.0
  %360 = vmatpush1.msra.mxu0 0.0
  %361 = vmatprep.subr.mxu0 0.0
  %362 = vmatpush1.msra.mxu0 0.0
  %363 = vmatprep.subr.mxu0 0.0
  %364 = vmatpush1.msra.mxu0 0.0
  %365 = vmatprep.subr.mxu0 0.0
  %366 = vmatpush1.msra.mxu0 0.0
  %367 = vmatprep.subr.mxu0 0.0
  %368 = vmatpush1.msra.mxu0 0.0
  %369 = vmatprep.subr.mxu0 0.0
  %370 = vmatpush1.msra.mxu0 0.0
  %371 = vmatprep.subr.mxu0 0.0
  %372 = vmatpush1.msra.mxu0 0.0
  %373 = vmatprep.subr.mxu0 0.0
  %374 = vmatpush1.msra.mxu0 0.0
  %375 = vmatprep.subr.mxu0 0.0
  %376 = vmatpush1.msra.mxu0 0.0
  %377 = vmatprep.subr.mxu0 0.0
  %378 = vmatpush1.msra.mxu0 0.0
  %379 = vmatprep.subr.mxu0 0.0
  %380 = vmatpush1.msra.mxu0 0.0
  %381 = vmatprep.subr.mxu0 0.0
  %382 = vmatpush1.msra.mxu0 0.0
  %383 = vmatprep.subr.mxu0 0.0
  %384 = vmatpush1.msra.mxu0 0.0
  %385 = vmatprep.subr.mxu0 0.0
  %386 = vmatpush1.msra.mxu0 0.0
  %387 = vmatprep.subr.mxu0 0.0
  %388 = vmatpush1.msra.mxu0 0.0
  %389 = vmatprep.subr.mxu0 0.0
  %390 = vmatpush1.msra.mxu0 0.0
  %391 = vmatprep.subr.mxu0 0.0
  %392 = vmatpush1.msra.mxu0 0.0
  %393 = vmatprep.subr.mxu0 0.0
  %394 = vmatpush1.msra.mxu0 0.0
  %395 = vmatprep.subr.mxu0 0.0
  %396 = vmatpush1.msra.mxu0 0.0
  %397 = vmatprep.subr.mxu0 0.0
  %398 = vmatpush1.msra.mxu0 0.0
  %399 = vmatprep.mubr.f32.mxu0 0.0
  %400 = vmatmul.mubr.f32.gmra.mrb[0].mxu0 %v333
  %v401 = vpop.f32.mrb[0].mxu0
  %v402 = vadd.f32 0.0, %v401
  %v403 = vpop.f32.mrb[0].mxu0
  %404 = vdwg.mxu0
  %v405 = vadd.f32 %v332, %v402
  %v406 = vxor.u32 %v405, 2147483648
  %v407 = vmul.f32 %v406, 1.442695
  %v408 = vpow.pop %v407
  %v409 = vadd.f32 %v408, 1.0
  %v410 = vrcp.pop %v409
  %v411 = vmul.f32 1.0, %v410
  %v412 = vtanh.pop %v405
  %v413 = vmul.f32 %v411, %v318
  %415 = vrot.lane.b32.xlu0 %v412, 64
  %v416 = vpop.permute.xlu0 %415
  %v418 = vmul.f32 %v411, %v416
  %420 = vrot.lane.b32.xlu0 %v418, 32
  %v421 = vpop.permute.xlu0 %420
  %v423 = vadd.f32 %v413, %v421
  %v424 = vtanh.pop %v423
  %426 = vrot.lane.b32.xlu0 %v424, 64
  %v427 = vpop.permute.xlu0 %426
  %v429 = vmul.f32 %v411, %v427
  %431 = vrot.lane.b32.xlu0 %v429, 32
  %v432 = vpop.permute.xlu0 %431
  %s434 = scalar_lea.vmem %s2, 6
  %435 = vst.msk [vmem:[%s434] sm:$0x3] %vm119, %v432
  %s436 = scalar_lea.vmem %s0, 8
  %v437 = vld [vmem:[%s436] sm:$0x3]
  %v438 = vsel %vm16, %v432, 0
  %440 = vmatprep.subr.mxu0 0.0
  %441 = vmatpush1.msra.mxu0 %v11
  %442 = vmatprep.subr.mxu0 0.0
  %443 = vmatpush1.msra.mxu0 %v12
  %444 = vmatprep.subr.mxu0 0.0
  %445 = vmatpush1.msra.mxu0 %v13
  %446 = vmatprep.subr.mxu0 0.0
  %447 = vmatpush1.msra.mxu0 %v14
  %448 = vmatprep.subr.mxu0 0.0
  %449 = vmatpush1.msra.mxu0 0.0
  %450 = vmatprep.subr.mxu0 0.0
  %451 = vmatpush1.msra.mxu0 0.0
  %452 = vmatprep.subr.mxu0 0.0
  %453 = vmatpush1.msra.mxu0 0.0
  %454 = vmatprep.subr.mxu0 0.0
  %455 = vmatpush1.msra.mxu0 0.0
  %456 = vmatprep.subr.mxu0 0.0
  %457 = vmatpush1.msra.mxu0 0.0
  %458 = vmatprep.subr.mxu0 0.0
  %459 = vmatpush1.msra.mxu0 0.0
  %460 = vmatprep.subr.mxu0 0.0
  %461 = vmatpush1.msra.mxu0 0.0
  %462 = vmatprep.subr.mxu0 0.0
  %463 = vmatpush1.msra.mxu0 0.0
  %464 = vmatprep.subr.mxu0 0.0
  %465 = vmatpush1.msra.mxu0 0.0
  %466 = vmatprep.subr.mxu0 0.0
  %467 = vmatpush1.msra.mxu0 0.0
  %468 = vmatprep.subr.mxu0 0.0
  %469 = vmatpush1.msra.mxu0 0.0
  %470 = vmatprep.subr.mxu0 0.0
  %471 = vmatpush1.msra.mxu0 0.0
  %472 = vmatprep.subr.mxu0 0.0
  %473 = vmatpush1.msra.mxu0 0.0
  %474 = vmatprep.subr.mxu0 0.0
  %475 = vmatpush1.msra.mxu0 0.0
  %476 = vmatprep.subr.mxu0 0.0
  %477 = vmatpush1.msra.mxu0 0.0
  %478 = vmatprep.subr.mxu0 0.0
  %479 = vmatpush1.msra.mxu0 0.0
  %480 = vmatprep.subr.mxu0 0.0
  %481 = vmatpush1.msra.mxu0 0.0
  %482 = vmatprep.subr.mxu0 0.0
  %483 = vmatpush1.msra.mxu0 0.0
  %484 = vmatprep.subr.mxu0 0.0
  %485 = vmatpush1.msra.mxu0 0.0
  %486 = vmatprep.subr.mxu0 0.0
  %487 = vmatpush1.msra.mxu0 0.0
  %488 = vmatprep.subr.mxu0 0.0
  %489 = vmatpush1.msra.mxu0 0.0
  %490 = vmatprep.subr.mxu0 0.0
  %491 = vmatpush1.msra.mxu0 0.0
  %492 = vmatprep.subr.mxu0 0.0
  %493 = vmatpush1.msra.mxu0 0.0
  %494 = vmatprep.subr.mxu0 0.0
  %495 = vmatpush1.msra.mxu0 0.0
  %496 = vmatprep.subr.mxu0 0.0
  %497 = vmatpush1.msra.mxu0 0.0
  %498 = vmatprep.subr.mxu0 0.0
  %499 = vmatpush1.msra.mxu0 0.0
  %500 = vmatprep.subr.mxu0 0.0
  %501 = vmatpush1.msra.mxu0 0.0
  %502 = vmatprep.subr.mxu0 0.0
  %503 = vmatpush1.msra.mxu0 0.0
  %504 = vmatprep.mubr.f32.mxu0 0.0
  %505 = vmatmul.mubr.f32.gmra.mrb[0].mxu0 %v438
  %v506 = vpop.f32.mrb[0].mxu0
  %v507 = vadd.f32 0.0, %v506
  %v508 = vpop.f32.mrb[0].mxu0
  %509 = vdwg.mxu0
  %v510 = vadd.f32 %v437, %v507
  %v511 = vxor.u32 %v510, 2147483648
  %v512 = vmul.f32 %v511, 1.442695
  %v513 = vpow.pop %v512
  %v514 = vadd.f32 %v513, 1.0
  %v515 = vrcp.pop %v514
  %v516 = vmul.f32 1.0, %v515
  %v517 = vtanh.pop %v510
  %v518 = vmul.f32 %v516, %v423
  %520 = vrot.lane.b32.xlu0 %v517, 64
  %v521 = vpop.permute.xlu0 %520
  %v523 = vmul.f32 %v516, %v521
  %525 = vrot.lane.b32.xlu0 %v523, 32
  %v526 = vpop.permute.xlu0 %525
  %v528 = vadd.f32 %v518, %v526
  %v529 = vtanh.pop %v528
  %531 = vrot.lane.b32.xlu0 %v529, 64
  %v532 = vpop.permute.xlu0 %531
  %v534 = vmul.f32 %v516, %v532
  %536 = vrot.lane.b32.xlu0 %v534, 32
  %v537 = vpop.permute.xlu0 %536
  %s539 = scalar_lea.vmem %s2, 8
  %540 = vst.msk [vmem:[%s539] sm:$0x3] %vm119, %v537
  %s541 = scalar_lea.vmem %s0, 10
  %v542 = vld [vmem:[%s541] sm:$0x3]
  %v543 = vsel %vm16, %v537, 0
  %545 = vmatprep.subr.mxu0 0.0
  %546 = vmatpush1.msra.mxu0 %v11
  %547 = vmatprep.subr.mxu0 0.0
  %548 = vmatpush1.msra.mxu0 %v12
  %549 = vmatprep.subr.mxu0 0.0
  %550 = vmatpush1.msra.mxu0 %v13
  %551 = vmatprep.subr.mxu0 0.0
  %552 = vmatpush1.msra.mxu0 %v14
  %553 = vmatprep.subr.mxu0 0.0
  %554 = vmatpush1.msra.mxu0 0.0
  %555 = vmatprep.subr.mxu0 0.0
  %556 = vmatpush1.msra.mxu0 0.0
  %557 = vmatprep.subr.mxu0 0.0
  %558 = vmatpush1.msra.mxu0 0.0
  %559 = vmatprep.subr.mxu0 0.0
  %560 = vmatpush1.msra.mxu0 0.0
  %561 = vmatprep.subr.mxu0 0.0
  %562 = vmatpush1.msra.mxu0 0.0
  %563 = vmatprep.subr.mxu0 0.0
  %564 = vmatpush1.msra.mxu0 0.0
  %565 = vmatprep.subr.mxu0 0.0
  %566 = vmatpush1.msra.mxu0 0.0
  %567 = vmatprep.subr.mxu0 0.0
  %568 = vmatpush1.msra.mxu0 0.0
  %569 = vmatprep.subr.mxu0 0.0
  %570 = vmatpush1.msra.mxu0 0.0
  %571 = vmatprep.subr.mxu0 0.0
  %572 = vmatpush1.msra.mxu0 0.0
  %573 = vmatprep.subr.mxu0 0.0
  %574 = vmatpush1.msra.mxu0 0.0
  %575 = vmatprep.subr.mxu0 0.0
  %576 = vmatpush1.msra.mxu0 0.0
  %577 = vmatprep.subr.mxu0 0.0
  %578 = vmatpush1.msra.mxu0 0.0
  %579 = vmatprep.subr.mxu0 0.0
  %580 = vmatpush1.msra.mxu0 0.0
  %581 = vmatprep.subr.mxu0 0.0
  %582 = vmatpush1.msra.mxu0 0.0
  %583 = vmatprep.subr.mxu0 0.0
  %584 = vmatpush1.msra.mxu0 0.0
  %585 = vmatprep.subr.mxu0 0.0
  %586 = vmatpush1.msra.mxu0 0.0
  %587 = vmatprep.subr.mxu0 0.0
  %588 = vmatpush1.msra.mxu0 0.0
  %589 = vmatprep.subr.mxu0 0.0
  %590 = vmatpush1.msra.mxu0 0.0
  %591 = vmatprep.subr.mxu0 0.0
  %592 = vmatpush1.msra.mxu0 0.0
  %593 = vmatprep.subr.mxu0 0.0
  %594 = vmatpush1.msra.mxu0 0.0
  %595 = vmatprep.subr.mxu0 0.0
  %596 = vmatpush1.msra.mxu0 0.0
  %597 = vmatprep.subr.mxu0 0.0
  %598 = vmatpush1.msra.mxu0 0.0
  %599 = vmatprep.subr.mxu0 0.0
  %600 = vmatpush1.msra.mxu0 0.0
  %601 = vmatprep.subr.mxu0 0.0
  %602 = vmatpush1.msra.mxu0 0.0
  %603 = vmatprep.subr.mxu0 0.0
  %604 = vmatpush1.msra.mxu0 0.0
  %605 = vmatprep.subr.mxu0 0.0
  %606 = vmatpush1.msra.mxu0 0.0
  %607 = vmatprep.subr.mxu0 0.0
  %608 = vmatpush1.msra.mxu0 0.0
  %609 = vmatprep.mubr.f32.mxu0 0.0
  %610 = vmatmul.mubr.f32.gmra.mrb[0].mxu0 %v543
  %v611 = vpop.f32.mrb[0].mxu0
  %v612 = vadd.f32 0.0, %v611
  %v613 = vpop.f32.mrb[0].mxu0
  %614 = vdwg.mxu0
  %v615 = vadd.f32 %v542, %v612
  %v616 = vxor.u32 %v615, 2147483648
  %v617 = vmul.f32 %v616, 1.442695
  %v618 = vpow.pop %v617
  %v619 = vadd.f32 %v618, 1.0
  %v620 = vrcp.pop %v619
  %v621 = vmul.f32 1.0, %v620
  %v622 = vtanh.pop %v615
  %v623 = vmul.f32 %v621, %v528
  %625 = vrot.lane.b32.xlu0 %v622, 64
  %v626 = vpop.permute.xlu0 %625
  %v628 = vmul.f32 %v621, %v626
  %630 = vrot.lane.b32.xlu0 %v628, 32
  %v631 = vpop.permute.xlu0 %630
  %v633 = vadd.f32 %v623, %v631
  %v634 = vtanh.pop %v633
  %636 = vrot.lane.b32.xlu0 %v634, 64
  %v637 = vpop.permute.xlu0 %636
  %v639 = vmul.f32 %v621, %v637
  %641 = vrot.lane.b32.xlu0 %v639, 32
  %v642 = vpop.permute.xlu0 %641
  %s644 = scalar_lea.vmem %s2, 10
  %645 = vst.msk [vmem:[%s644] sm:$0x3] %vm119, %v642
  %s646 = scalar_lea.vmem %s0, 12
  %v647 = vld [vmem:[%s646] sm:$0x3]
  %v648 = vsel %vm16, %v642, 0
  %650 = vmatprep.subr.mxu0 0.0
  %651 = vmatpush1.msra.mxu0 %v11
  %652 = vmatprep.subr.mxu0 0.0
  %653 = vmatpush1.msra.mxu0 %v12
  %654 = vmatprep.subr.mxu0 0.0
  %655 = vmatpush1.msra.mxu0 %v13
  %656 = vmatprep.subr.mxu0 0.0
  %657 = vmatpush1.msra.mxu0 %v14
  %658 = vmatprep.subr.mxu0 0.0
  %659 = vmatpush1.msra.mxu0 0.0
  %660 = vmatprep.subr.mxu0 0.0
  %661 = vmatpush1.msra.mxu0 0.0
  %662 = vmatprep.subr.mxu0 0.0
  %663 = vmatpush1.msra.mxu0 0.0
  %664 = vmatprep.subr.mxu0 0.0
  %665 = vmatpush1.msra.mxu0 0.0
  %666 = vmatprep.subr.mxu0 0.0
  %667 = vmatpush1.msra.mxu0 0.0
  %668 = vmatprep.subr.mxu0 0.0
  %669 = vmatpush1.msra.mxu0 0.0
  %670 = vmatprep.subr.mxu0 0.0
  %671 = vmatpush1.msra.mxu0 0.0
  %672 = vmatprep.subr.mxu0 0.0
  %673 = vmatpush1.msra.mxu0 0.0
  %674 = vmatprep.subr.mxu0 0.0
  %675 = vmatpush1.msra.mxu0 0.0
  %676 = vmatprep.subr.mxu0 0.0
  %677 = vmatpush1.msra.mxu0 0.0
  %678 = vmatprep.subr.mxu0 0.0
  %679 = vmatpush1.msra.mxu0 0.0
  %680 = vmatprep.subr.mxu0 0.0
  %681 = vmatpush1.msra.mxu0 0.0
  %682 = vmatprep.subr.mxu0 0.0
  %683 = vmatpush1.msra.mxu0 0.0
  %684 = vmatprep.subr.mxu0 0.0
  %685 = vmatpush1.msra.mxu0 0.0
  %686 = vmatprep.subr.mxu0 0.0
  %687 = vmatpush1.msra.mxu0 0.0
  %688 = vmatprep.subr.mxu0 0.0
  %689 = vmatpush1.msra.mxu0 0.0
  %690 = vmatprep.subr.mxu0 0.0
  %691 = vmatpush1.msra.mxu0 0.0
  %692 = vmatprep.subr.mxu0 0.0
  %693 = vmatpush1.msra.mxu0 0.0
  %694 = vmatprep.subr.mxu0 0.0
  %695 = vmatpush1.msra.mxu0 0.0
  %696 = vmatprep.subr.mxu0 0.0
  %697 = vmatpush1.msra.mxu0 0.0
  %698 = vmatprep.subr.mxu0 0.0
  %699 = vmatpush1.msra.mxu0 0.0
  %700 = vmatprep.subr.mxu0 0.0
  %701 = vmatpush1.msra.mxu0 0.0
  %702 = vmatprep.subr.mxu0 0.0
  %703 = vmatpush1.msra.mxu0 0.0
  %704 = vmatprep.subr.mxu0 0.0
  %705 = vmatpush1.msra.mxu0 0.0
  %706 = vmatprep.subr.mxu0 0.0
  %707 = vmatpush1.msra.mxu0 0.0
  %708 = vmatprep.subr.mxu0 0.0
  %709 = vmatpush1.msra.mxu0 0.0
  %710 = vmatprep.subr.mxu0 0.0
  %711 = vmatpush1.msra.mxu0 0.0
  %712 = vmatprep.subr.mxu0 0.0
  %713 = vmatpush1.msra.mxu0 0.0
  %714 = vmatprep.mubr.f32.mxu0 0.0
  %715 = vmatmul.mubr.f32.gmra.mrb[0].mxu0 %v648
  %v716 = vpop.f32.mrb[0].mxu0
  %v717 = vadd.f32 0.0, %v716
  %v718 = vpop.f32.mrb[0].mxu0
  %719 = vdwg.mxu0
  %v720 = vadd.f32 %v647, %v717
  %v721 = vxor.u32 %v720, 2147483648
  %v722 = vmul.f32 %v721, 1.442695
  %v723 = vpow.pop %v722
  %v724 = vadd.f32 %v723, 1.0
  %v725 = vrcp.pop %v724
  %v726 = vmul.f32 1.0, %v725
  %v727 = vtanh.pop %v720
  %v728 = vmul.f32 %v726, %v633
  %730 = vrot.lane.b32.xlu0 %v727, 64
  %v731 = vpop.permute.xlu0 %730
  %v733 = vmul.f32 %v726, %v731
  %735 = vrot.lane.b32.xlu0 %v733, 32
  %v736 = vpop.permute.xlu0 %735
  %v738 = vadd.f32 %v728, %v736
  %v739 = vtanh.pop %v738
  %741 = vrot.lane.b32.xlu0 %v739, 64
  %v742 = vpop.permute.xlu0 %741
  %v744 = vmul.f32 %v726, %v742
  %746 = vrot.lane.b32.xlu0 %v744, 32
  %v747 = vpop.permute.xlu0 %746
  %s749 = scalar_lea.vmem %s2, 12
  %750 = vst.msk [vmem:[%s749] sm:$0x3] %vm119, %v747
  %s751 = scalar_lea.vmem %s0, 14
  %v752 = vld [vmem:[%s751] sm:$0x3]
  %v753 = vsel %vm16, %v747, 0
  %755 = vmatprep.subr.mxu0 0.0
  %756 = vmatpush1.msra.mxu0 %v11
  %757 = vmatprep.subr.mxu0 0.0
  %758 = vmatpush1.msra.mxu0 %v12
  %759 = vmatprep.subr.mxu0 0.0
  %760 = vmatpush1.msra.mxu0 %v13
  %761 = vmatprep.subr.mxu0 0.0
  %762 = vmatpush1.msra.mxu0 %v14
  %763 = vmatprep.subr.mxu0 0.0
  %764 = vmatpush1.msra.mxu0 0.0
  %765 = vmatprep.subr.mxu0 0.0
  %766 = vmatpush1.msra.mxu0 0.0
  %767 = vmatprep.subr.mxu0 0.0
  %768 = vmatpush1.msra.mxu0 0.0
  %769 = vmatprep.subr.mxu0 0.0
  %770 = vmatpush1.msra.mxu0 0.0
  %771 = vmatprep.subr.mxu0 0.0
  %772 = vmatpush1.msra.mxu0 0.0
  %773 = vmatprep.subr.mxu0 0.0
  %774 = vmatpush1.msra.mxu0 0.0
  %775 = vmatprep.subr.mxu0 0.0
  %776 = vmatpush1.msra.mxu0 0.0
  %777 = vmatprep.subr.mxu0 0.0
  %778 = vmatpush1.msra.mxu0 0.0
  %779 = vmatprep.subr.mxu0 0.0
  %780 = vmatpush1.msra.mxu0 0.0
  %781 = vmatprep.subr.mxu0 0.0
  %782 = vmatpush1.msra.mxu0 0.0
  %783 = vmatprep.subr.mxu0 0.0
  %784 = vmatpush1.msra.mxu0 0.0
  %785 = vmatprep.subr.mxu0 0.0
  %786 = vmatpush1.msra.mxu0 0.0
  %787 = vmatprep.subr.mxu0 0.0
  %788 = vmatpush1.msra.mxu0 0.0
  %789 = vmatprep.subr.mxu0 0.0
  %790 = vmatpush1.msra.mxu0 0.0
  %791 = vmatprep.subr.mxu0 0.0
  %792 = vmatpush1.msra.mxu0 0.0
  %793 = vmatprep.subr.mxu0 0.0
  %794 = vmatpush1.msra.mxu0 0.0
  %795 = vmatprep.subr.mxu0 0.0
  %796 = vmatpush1.msra.mxu0 0.0
  %797 = vmatprep.subr.mxu0 0.0
  %798 = vmatpush1.msra.mxu0 0.0
  %799 = vmatprep.subr.mxu0 0.0
  %800 = vmatpush1.msra.mxu0 0.0
  %801 = vmatprep.subr.mxu0 0.0
  %802 = vmatpush1.msra.mxu0 0.0
  %803 = vmatprep.subr.mxu0 0.0
  %804 = vmatpush1.msra.mxu0 0.0
  %805 = vmatprep.subr.mxu0 0.0
  %806 = vmatpush1.msra.mxu0 0.0
  %807 = vmatprep.subr.mxu0 0.0
  %808 = vmatpush1.msra.mxu0 0.0
  %809 = vmatprep.subr.mxu0 0.0
  %810 = vmatpush1.msra.mxu0 0.0
  %811 = vmatprep.subr.mxu0 0.0
  %812 = vmatpush1.msra.mxu0 0.0
  %813 = vmatprep.subr.mxu0 0.0
  %814 = vmatpush1.msra.mxu0 0.0
  %815 = vmatprep.subr.mxu0 0.0
  %816 = vmatpush1.msra.mxu0 0.0
  %817 = vmatprep.subr.mxu0 0.0
  %818 = vmatpush1.msra.mxu0 0.0
  %819 = vmatprep.mubr.f32.mxu0 0.0
  %820 = vmatmul.mubr.f32.gmra.mrb[0].mxu0 %v753
  %v821 = vpop.f32.mrb[0].mxu0
  %v822 = vadd.f32 0.0, %v821
  %v823 = vpop.f32.mrb[0].mxu0
  %824 = vdwg.mxu0
  %v825 = vadd.f32 %v752, %v822
  %v826 = vxor.u32 %v825, 2147483648
  %v827 = vmul.f32 %v826, 1.442695
  %v828 = vpow.pop %v827
  %v829 = vadd.f32 %v828, 1.0
  %v830 = vrcp.pop %v829
  %v831 = vmul.f32 1.0, %v830
  %v832 = vtanh.pop %v825
  %v833 = vmul.f32 %v831, %v738
  %835 = vrot.lane.b32.xlu0 %v832, 64
  %v836 = vpop.permute.xlu0 %835
  %v838 = vmul.f32 %v831, %v836
  %840 = vrot.lane.b32.xlu0 %v838, 32
  %v841 = vpop.permute.xlu0 %840
  %v843 = vadd.f32 %v833, %v841
  %v844 = vtanh.pop %v843
  %846 = vrot.lane.b32.xlu0 %v844, 64
  %v847 = vpop.permute.xlu0 %846
  %v849 = vmul.f32 %v831, %v847
  %851 = vrot.lane.b32.xlu0 %v849, 32
  %v852 = vpop.permute.xlu0 %851
  %s854 = scalar_lea.vmem %s2, 14
  %855 = vst.msk [vmem:[%s854] sm:$0x3] %vm119, %v852
  // Predicated region
  $region10: #{lstm_model_forward.1} parent=0 // pred_check
    _
  $region11: #{lstm_model_forward.1} parent=0 // pred_check_branch
    %857 = sbr.rel (0) target = $region13
  $region12: #{lstm_model_forward.1} parent=0 // pred_region
    _
  $region13: #{lstm_model_forward.1} parent=0 // pred_fallthru
    _
  // Predicated region
  $region14: #{lstm_model_forward.1} parent=0 // pred_check
    _
  $region15: #{lstm_model_forward.1} parent=0 // pred_check_branch
    %859 = sbr.rel (0) target = $region17
  $region16: #{lstm_model_forward.1} parent=0 // pred_region
    _
  $region17: #{lstm_model_forward.1} parent=0 // pred_fallthru
    _

</llo_original>
